<compile_context>
chip_gen: v6e
topology: v6e:2x2x1
jax: 0.10.0
libtpu: 0.0.40
codegen_flags: <defaults>
</compile_context>

<pallas_src>
import jax
import jax.numpy as jnp
from jax import lax
from jax.experimental import pallas as pl
from jax.experimental.pallas import tpu as pltpu


def basic_block_kernel(x_ref, m1_ref, m2_ref, sb_ref, out_ref, xpad, acc):
    """One image per grid step.

    x_ref : (H, W*C)  bf16   input / identity (lane-dense row layout)
    m*_ref: (3, W*C, W*C) bf16 banded conv matrices (one per kernel row ky)
    sb_ref: (4, W*C)  f32    folded BN [scale1, bias1, scale2, bias2]
    out_ref: (H, W*C) f32    output
    xpad  : (H+2, W*C) f32   H-padded activation scratch (reused by both convs)
    acc   : (H, W*C)  f32    matmul accumulator
    """
    H, WC = x_ref.shape

    # Stage activations into the H-padded scratch. Only the two border rows are
    # zeroed (never the whole buffer); they stay zero for the second conv too.
    xpad[0:1, :] = jnp.zeros((1, WC), jnp.float32)
    xpad[H + 1:H + 2, :] = jnp.zeros((1, WC), jnp.float32)
    xpad[1:H + 1, :] = x_ref[...].astype(jnp.float32)

    def conv3x3(m_ref):
        # One MXU matmul per kernel row; kx taps and W zero-padding are folded
        # into the banded matrices.  bf16 operands, f32 accumulation, ref-backed
        # accumulator initialized from the first tap.
        acc[...] = jnp.dot(xpad[0:H, :].astype(jnp.bfloat16), m_ref[0],
                           preferred_element_type=jnp.float32)
        acc[...] += jnp.dot(xpad[1:H + 1, :].astype(jnp.bfloat16), m_ref[1],
                            preferred_element_type=jnp.float32)
        acc[...] += jnp.dot(xpad[2:H + 2, :].astype(jnp.bfloat16), m_ref[2],
                            preferred_element_type=jnp.float32)

    # ---- conv1 -> BN1 -> ReLU ------------------------------------------------
    conv3x3(m1_ref)
    y1 = jnp.maximum(acc[...] * sb_ref[0:1, :] + sb_ref[1:2, :], 0.0)

    # ---- conv2 (reuse the same padded scratch) --------------------------------
    xpad[1:H + 1, :] = y1
    conv3x3(m2_ref)

    # ---- BN2 -> +identity -> ReLU --------------------------------------------
    y2 = acc[...] * sb_ref[2:3, :] + sb_ref[3:4, :]
    out_ref[...] = jnp.maximum(y2 + x_ref[...].astype(jnp.float32), 0.0)


def _band_matrices(w_oihw, W):
    """Fold a 3x3 conv (OIHW weights) into 3 banded (W*Cin, W*Cout) matrices,
    one per kernel row ky.  Entry M_ky[(w+kx-1)*Cin + ci, w*Cout + co] =
    weight[co, ci, ky, kx] for in-range w+kx-1; out-of-range taps are simply
    absent, which implements the zero padding along W."""
    w_hwio = jnp.transpose(w_oihw, (2, 3, 1, 0)).astype(jnp.float32)  # (3,3,Ci,Co)
    mats = []
    for ky in range(3):
        m = sum(jnp.kron(jnp.eye(W, k=1 - kx, dtype=jnp.float32), w_hwio[ky, kx])
                for kx in range(3))
        mats.append(m)
    return jnp.stack(mats).astype(jnp.bfloat16)  # (3, W*Cin, W*Cout)


def basic_block_pallas(x_nchw, w1_oihw, s1, b1, w2_oihw, s2, b2):
    """Wrapper: NCHW/OIHW in (PyTorch convention), NCHW out.

    NOTE: in a real model the activations would stay NHWC end-to-end and the
    weight/BN folding below would be done once at parameter-load time; the
    transposes here exist only to match the PyTorch test convention."""
    N, C, H, W = x_nchw.shape
    WC = W * C

    # Lane-dense activation layout: (N, H, W*C), bf16 (halves DMA/VMEM bytes).
    x_l = (jnp.transpose(x_nchw, (0, 2, 3, 1))
           .reshape(N, H, WC).astype(jnp.bfloat16))

    m1 = _band_matrices(w1_oihw, W)            # (3, WC, WC) bf16
    m2 = _band_matrices(w2_oihw, W)            # (3, WC, WC) bf16
    sb = jnp.stack([jnp.tile(s1, W), jnp.tile(b1, W),
                    jnp.tile(s2, W), jnp.tile(b2, W)]).astype(jnp.float32)  # (4, WC)

    # Explicit VMEM budget: tiles + resident weights must fit the scoped limit.
    vmem_limit = 32 * 1024 * 1024
    per_step_bytes = (2 * H * WC * 2            # double-buffered bf16 input block
                      + 2 * H * WC * 4          # double-buffered f32 output block
                      + 2 * 3 * WC * WC * 2     # both banded weight stacks (bf16)
                      + 4 * WC * 4              # folded BN table
                      + (H + 2) * WC * 4        # padded activation scratch
                      + H * WC * 4)             # f32 accumulator scratch
    assert per_step_bytes < vmem_limit, (
        f"per-step VMEM estimate {per_step_bytes} exceeds limit {vmem_limit}")

    out_l = pl.pallas_call(
        basic_block_kernel,
        out_shape=jax.ShapeDtypeStruct((N, H, WC), jnp.float32),
        grid=(N,),
        in_specs=[
            pl.BlockSpec((None, H, WC), lambda n: (n, 0, 0)),   # x (per image)
            pl.BlockSpec((3, WC, WC), lambda n: (0, 0, 0)),     # conv1 bands
            pl.BlockSpec((3, WC, WC), lambda n: (0, 0, 0)),     # conv2 bands
            pl.BlockSpec((4, WC), lambda n: (0, 0)),            # folded BN
        ],
        out_specs=pl.BlockSpec((None, H, WC), lambda n: (n, 0, 0)),
        scratch_shapes=[
            pltpu.VMEM((H + 2, WC), jnp.float32),   # H-padded activations (reused)
            pltpu.VMEM((H, WC), jnp.float32),       # matmul accumulator
        ],
        compiler_params=pltpu.CompilerParams(
            dimension_semantics=("parallel",),
            vmem_limit_bytes=vmem_limit),
    )(x_l, m1, m2, sb)

    out_nhwc = out_l.reshape(N, H, W, C)
    return jnp.transpose(out_nhwc, (0, 3, 1, 2))


def basic_block_reference(x, w1, s1, b1, w2, s2, b2):
    """Plain-JAX reference (NCHW), PyTorch eval-mode semantics, with the same
    bf16 matmul inputs / f32 accumulation as the kernel."""
    def conv(inp, w):
        return lax.conv_general_dilated(
            inp.astype(jnp.bfloat16), w.astype(jnp.bfloat16),
            window_strides=(1, 1), padding=((1, 1), (1, 1)),
            dimension_numbers=("NCHW", "OIHW", "NCHW"),
            preferred_element_type=jnp.float32)

    xq = x.astype(jnp.bfloat16).astype(jnp.float32)   # kernel sees bf16 input
    y = conv(xq, w1)
    y = y * s1[None, :, None, None] + b1[None, :, None, None]
    y = jnp.maximum(y, 0.0)
    y = conv(y, w2)
    y = y * s2[None, :, None, None] + b2[None, :, None, None]
    return jnp.maximum(y + xq, 0.0)


if __name__ == "__main__":
    key = jax.random.PRNGKey(0)
    kx, kw1, kw2, kg1, kb1, km1, kv1, kg2, kb2, km2, kv2 = jax.random.split(key, 11)

    N, C, H, W = 2, 4, 16, 16  # inplanes == planes == 4, stride=1, no downsample
    eps = 1e-5

    x = jax.random.normal(kx, (N, C, H, W), jnp.float32)
    w1 = jax.random.normal(kw1, (C, C, 3, 3), jnp.float32) * 0.2   # OIHW, bias=False
    w2 = jax.random.normal(kw2, (C, C, 3, 3), jnp.float32) * 0.2

    # deterministic BatchNorm parameters / running stats (eval mode)
    gamma1 = 1.0 + 0.1 * jax.random.normal(kg1, (C,), jnp.float32)
    beta1 = 0.1 * jax.random.normal(kb1, (C,), jnp.float32)
    mean1 = 0.1 * jax.random.normal(km1, (C,), jnp.float32)
    var1 = 1.0 + 0.1 * jax.random.uniform(kv1, (C,), jnp.float32)
    gamma2 = 1.0 + 0.1 * jax.random.normal(kg2, (C,), jnp.float32)
    beta2 = 0.1 * jax.random.normal(kb2, (C,), jnp.float32)
    mean2 = 0.1 * jax.random.normal(km2, (C,), jnp.float32)
    var2 = 1.0 + 0.1 * jax.random.uniform(kv2, (C,), jnp.float32)

    # fold BN into per-channel scale / bias (eval mode)
    s1 = gamma1 / jnp.sqrt(var1 + eps)
    b1 = beta1 - mean1 * s1
    s2 = gamma2 / jnp.sqrt(var2 + eps)
    b2 = beta2 - mean2 * s2

    out = basic_block_pallas(x, w1, s1, b1, w2, s2, b2)
    out = jax.block_until_ready(out)

    ref = basic_block_reference(x, w1, s1, b1, w2, s2, b2)
    max_err = float(jnp.max(jnp.abs(out - ref)))
    assert max_err < 2e-2, f"mismatch vs reference: {max_err}"

    print("KERNEL_OK")
</pallas_src>

<mosaic_0001>
module attributes {stable_mosaic.version = 11 : i64} {
  func.func @basic_block_kernel(%arg0: i32, %arg1: memref<1x16x64xbf16, #tpu.memory_space<vmem>>, %arg2: memref<3x64x64xbf16, #tpu.memory_space<vmem>>, %arg3: memref<3x64x64xbf16, #tpu.memory_space<vmem>>, %arg4: memref<4x64xf32, #tpu.memory_space<vmem>>, %arg5: memref<1x16x64xf32, #tpu.memory_space<vmem>>, %arg6: memref<18x64xf32, #tpu.memory_space<vmem>>, %arg7: memref<16x64xf32, #tpu.memory_space<vmem>>) attributes {dimension_semantics = [#tpu.dimension_semantics<parallel>], iteration_bounds = array<i64: 2>, scalar_prefetch = 0 : i64, scratch_operands = 2 : i64, tpu.core_type = #tpu.core_type<tc>, window_params = [{transform_indices = @transform_0, window_bounds = array<i64: 1, 16, 64>}, {pipeline_mode = #tpu.pipeline_mode<synchronous>, transform_indices = @transform_1, window_bounds = array<i64: 3, 64, 64>}, {pipeline_mode = #tpu.pipeline_mode<synchronous>, transform_indices = @transform_2, window_bounds = array<i64: 3, 64, 64>}, {pipeline_mode = #tpu.pipeline_mode<synchronous>, transform_indices = @transform_3, window_bounds = array<i64: 4, 64>}, {transform_indices = @transform_4, window_bounds = array<i64: 1, 16, 64>}]} {
    %cst = arith.constant 0.000000e+00 : f32
    %0 = vector.broadcast %cst : f32 to vector<1x64xf32>
    %c0 = arith.constant 0 : index
    %c0_0 = arith.constant 0 : index
    %1 = vector.load %arg6[%c0, %c0_0] : memref<18x64xf32, #tpu.memory_space<vmem>>, vector<1x64xf32>
    tpu.vector_store %arg6[%c0, %c0_0], %0 {strides = array<i32>} : memref<18x64xf32, #tpu.memory_space<vmem>>, vector<1x64xf32>,
    %cst_1 = arith.constant 0.000000e+00 : f32
    %2 = vector.broadcast %cst_1 : f32 to vector<1x64xf32>
    %c17 = arith.constant 17 : index
    %c0_2 = arith.constant 0 : index
    %3 = vector.load %arg6[%c17, %c0_2] : memref<18x64xf32, #tpu.memory_space<vmem>>, vector<1x64xf32>
    tpu.vector_store %arg6[%c17, %c0_2], %2 {strides = array<i32>} : memref<18x64xf32, #tpu.memory_space<vmem>>, vector<1x64xf32>,
    %c0_3 = arith.constant 0 : index
    %c0_4 = arith.constant 0 : index
    %c0_5 = arith.constant 0 : index
    %4 = vector.load %arg1[%c0_3, %c0_4, %c0_5] : memref<1x16x64xbf16, #tpu.memory_space<vmem>>, vector<1x16x64xbf16>
    %5 = vector.shape_cast %4 : vector<1x16x64xbf16> to vector<16x64xbf16>
    %6 = arith.extf %5 : vector<16x64xbf16> to vector<16x64xf32>
    %c1 = arith.constant 1 : index
    %c0_6 = arith.constant 0 : index
    %7 = vector.load %arg6[%c1, %c0_6] : memref<18x64xf32, #tpu.memory_space<vmem>>, vector<16x64xf32>
    tpu.vector_store %arg6[%c1, %c0_6], %6 {strides = array<i32>} : memref<18x64xf32, #tpu.memory_space<vmem>>, vector<16x64xf32>,
    %c0_7 = arith.constant 0 : index
    %c0_8 = arith.constant 0 : index
    %8 = vector.load %arg6[%c0_7, %c0_8] : memref<18x64xf32, #tpu.memory_space<vmem>>, vector<16x64xf32>
    %9 = arith.truncf %8 : vector<16x64xf32> to vector<16x64xbf16>
    %c0_9 = arith.constant 0 : index
    %c0_10 = arith.constant 0 : index
    %c0_11 = arith.constant 0 : index
    %10 = vector.load %arg2[%c0_9, %c0_10, %c0_11] : memref<3x64x64xbf16, #tpu.memory_space<vmem>>, vector<1x64x64xbf16>
    %11 = vector.shape_cast %10 : vector<1x64x64xbf16> to vector<64x64xbf16>
    %cst_12 = arith.constant dense<0.000000e+00> : vector<16x64xf32>
    %12 = tpu.matmul %9, %11, %cst_12 {dimension_numbers = #tpu.dot_dimension_numbers<[1], [0], [0], [1], [0, 0, 1, 1], [], []>} : vector<16x64xbf16>, vector<64x64xbf16>, vector<16x64xf32> -> vector<16x64xf32>
    %c0_13 = arith.constant 0 : index
    %c0_14 = arith.constant 0 : index
    %13 = vector.load %arg7[%c0_13, %c0_14] : memref<16x64xf32, #tpu.memory_space<vmem>>, vector<16x64xf32>
    tpu.vector_store %arg7[%c0_13, %c0_14], %12 {strides = array<i32>} : memref<16x64xf32, #tpu.memory_space<vmem>>, vector<16x64xf32>,
    %c0_15 = arith.constant 0 : index
    %c0_16 = arith.constant 0 : index
    %14 = vector.load %arg7[%c0_15, %c0_16] : memref<16x64xf32, #tpu.memory_space<vmem>>, vector<16x64xf32>
    %c1_17 = arith.constant 1 : index
    %c0_18 = arith.constant 0 : index
    %15 = vector.load %arg6[%c1_17, %c0_18] : memref<18x64xf32, #tpu.memory_space<vmem>>, vector<16x64xf32>
    %16 = arith.truncf %15 : vector<16x64xf32> to vector<16x64xbf16>
    %c1_19 = arith.constant 1 : index
    %c0_20 = arith.constant 0 : index
    %c0_21 = arith.constant 0 : index
    %17 = vector.load %arg2[%c1_19, %c0_20, %c0_21] : memref<3x64x64xbf16, #tpu.memory_space<vmem>>, vector<1x64x64xbf16>
    %18 = vector.shape_cast %17 : vector<1x64x64xbf16> to vector<64x64xbf16>
    %cst_22 = arith.constant dense<0.000000e+00> : vector<16x64xf32>
    %19 = tpu.matmul %16, %18, %cst_22 {dimension_numbers = #tpu.dot_dimension_numbers<[1], [0], [0], [1], [0, 0, 1, 1], [], []>} : vector<16x64xbf16>, vector<64x64xbf16>, vector<16x64xf32> -> vector<16x64xf32>
    %20 = arith.addf %14, %19 : vector<16x64xf32>
    %c0_23 = arith.constant 0 : index
    %c0_24 = arith.constant 0 : index
    %21 = vector.load %arg7[%c0_23, %c0_24] : memref<16x64xf32, #tpu.memory_space<vmem>>, vector<16x64xf32>
    tpu.vector_store %arg7[%c0_23, %c0_24], %20 {strides = array<i32>} : memref<16x64xf32, #tpu.memory_space<vmem>>, vector<16x64xf32>,
    %c0_25 = arith.constant 0 : index
    %c0_26 = arith.constant 0 : index
    %22 = vector.load %arg7[%c0_25, %c0_26] : memref<16x64xf32, #tpu.memory_space<vmem>>, vector<16x64xf32>
    %c2 = arith.constant 2 : index
    %c0_27 = arith.constant 0 : index
    %23 = vector.load %arg6[%c2, %c0_27] : memref<18x64xf32, #tpu.memory_space<vmem>>, vector<16x64xf32>
    %24 = arith.truncf %23 : vector<16x64xf32> to vector<16x64xbf16>
    %c2_28 = arith.constant 2 : index
    %c0_29 = arith.constant 0 : index
    %c0_30 = arith.constant 0 : index
    %25 = vector.load %arg2[%c2_28, %c0_29, %c0_30] : memref<3x64x64xbf16, #tpu.memory_space<vmem>>, vector<1x64x64xbf16>
    %26 = vector.shape_cast %25 : vector<1x64x64xbf16> to vector<64x64xbf16>
    %cst_31 = arith.constant dense<0.000000e+00> : vector<16x64xf32>
    %27 = tpu.matmul %24, %26, %cst_31 {dimension_numbers = #tpu.dot_dimension_numbers<[1], [0], [0], [1], [0, 0, 1, 1], [], []>} : vector<16x64xbf16>, vector<64x64xbf16>, vector<16x64xf32> -> vector<16x64xf32>
    %28 = arith.addf %22, %27 : vector<16x64xf32>
    %c0_32 = arith.constant 0 : index
    %c0_33 = arith.constant 0 : index
    %29 = vector.load %arg7[%c0_32, %c0_33] : memref<16x64xf32, #tpu.memory_space<vmem>>, vector<16x64xf32>
    tpu.vector_store %arg7[%c0_32, %c0_33], %28 {strides = array<i32>} : memref<16x64xf32, #tpu.memory_space<vmem>>, vector<16x64xf32>,
    %c0_34 = arith.constant 0 : index
    %c0_35 = arith.constant 0 : index
    %30 = vector.load %arg7[%c0_34, %c0_35] : memref<16x64xf32, #tpu.memory_space<vmem>>, vector<16x64xf32>
    %c0_36 = arith.constant 0 : index
    %c0_37 = arith.constant 0 : index
    %31 = vector.load %arg4[%c0_36, %c0_37] : memref<4x64xf32, #tpu.memory_space<vmem>>, vector<1x64xf32>
    %32 = vector.broadcast %31 : vector<1x64xf32> to vector<16x64xf32>
    %33 = arith.mulf %30, %32 : vector<16x64xf32>
    %c1_38 = arith.constant 1 : index
    %c0_39 = arith.constant 0 : index
    %34 = vector.load %arg4[%c1_38, %c0_39] : memref<4x64xf32, #tpu.memory_space<vmem>>, vector<1x64xf32>
    %35 = vector.broadcast %34 : vector<1x64xf32> to vector<16x64xf32>
    %36 = arith.addf %33, %35 : vector<16x64xf32>
    %cst_40 = arith.constant 0.000000e+00 : f32
    %37 = vector.broadcast %cst_40 : f32 to vector<16x64xf32>
    %38 = arith.maximumf %36, %37 : vector<16x64xf32>
    %c1_41 = arith.constant 1 : index
    %c0_42 = arith.constant 0 : index
    %39 = vector.load %arg6[%c1_41, %c0_42] : memref<18x64xf32, #tpu.memory_space<vmem>>, vector<16x64xf32>
    tpu.vector_store %arg6[%c1_41, %c0_42], %38 {strides = array<i32>} : memref<18x64xf32, #tpu.memory_space<vmem>>, vector<16x64xf32>,
    %c0_43 = arith.constant 0 : index
    %c0_44 = arith.constant 0 : index
    %40 = vector.load %arg6[%c0_43, %c0_44] : memref<18x64xf32, #tpu.memory_space<vmem>>, vector<16x64xf32>
    %41 = arith.truncf %40 : vector<16x64xf32> to vector<16x64xbf16>
    %c0_45 = arith.constant 0 : index
    %c0_46 = arith.constant 0 : index
    %c0_47 = arith.constant 0 : index
    %42 = vector.load %arg3[%c0_45, %c0_46, %c0_47] : memref<3x64x64xbf16, #tpu.memory_space<vmem>>, vector<1x64x64xbf16>
    %43 = vector.shape_cast %42 : vector<1x64x64xbf16> to vector<64x64xbf16>
    %cst_48 = arith.constant dense<0.000000e+00> : vector<16x64xf32>
    %44 = tpu.matmul %41, %43, %cst_48 {dimension_numbers = #tpu.dot_dimension_numbers<[1], [0], [0], [1], [0, 0, 1, 1], [], []>} : vector<16x64xbf16>, vector<64x64xbf16>, vector<16x64xf32> -> vector<16x64xf32>
    %c0_49 = arith.constant 0 : index
    %c0_50 = arith.constant 0 : index
    %45 = vector.load %arg7[%c0_49, %c0_50] : memref<16x64xf32, #tpu.memory_space<vmem>>, vector<16x64xf32>
    tpu.vector_store %arg7[%c0_49, %c0_50], %44 {strides = array<i32>} : memref<16x64xf32, #tpu.memory_space<vmem>>, vector<16x64xf32>,
    %c0_51 = arith.constant 0 : index
    %c0_52 = arith.constant 0 : index
    %46 = vector.load %arg7[%c0_51, %c0_52] : memref<16x64xf32, #tpu.memory_space<vmem>>, vector<16x64xf32>
    %c1_53 = arith.constant 1 : index
    %c0_54 = arith.constant 0 : index
    %47 = vector.load %arg6[%c1_53, %c0_54] : memref<18x64xf32, #tpu.memory_space<vmem>>, vector<16x64xf32>
    %48 = arith.truncf %47 : vector<16x64xf32> to vector<16x64xbf16>
    %c1_55 = arith.constant 1 : index
    %c0_56 = arith.constant 0 : index
    %c0_57 = arith.constant 0 : index
    %49 = vector.load %arg3[%c1_55, %c0_56, %c0_57] : memref<3x64x64xbf16, #tpu.memory_space<vmem>>, vector<1x64x64xbf16>
    %50 = vector.shape_cast %49 : vector<1x64x64xbf16> to vector<64x64xbf16>
    %cst_58 = arith.constant dense<0.000000e+00> : vector<16x64xf32>
    %51 = tpu.matmul %48, %50, %cst_58 {dimension_numbers = #tpu.dot_dimension_numbers<[1], [0], [0], [1], [0, 0, 1, 1], [], []>} : vector<16x64xbf16>, vector<64x64xbf16>, vector<16x64xf32> -> vector<16x64xf32>
    %52 = arith.addf %46, %51 : vector<16x64xf32>
    %c0_59 = arith.constant 0 : index
    %c0_60 = arith.constant 0 : index
    %53 = vector.load %arg7[%c0_59, %c0_60] : memref<16x64xf32, #tpu.memory_space<vmem>>, vector<16x64xf32>
    tpu.vector_store %arg7[%c0_59, %c0_60], %52 {strides = array<i32>} : memref<16x64xf32, #tpu.memory_space<vmem>>, vector<16x64xf32>,
    %c0_61 = arith.constant 0 : index
    %c0_62 = arith.constant 0 : index
    %54 = vector.load %arg7[%c0_61, %c0_62] : memref<16x64xf32, #tpu.memory_space<vmem>>, vector<16x64xf32>
    %c2_63 = arith.constant 2 : index
    %c0_64 = arith.constant 0 : index
    %55 = vector.load %arg6[%c2_63, %c0_64] : memref<18x64xf32, #tpu.memory_space<vmem>>, vector<16x64xf32>
    %56 = arith.truncf %55 : vector<16x64xf32> to vector<16x64xbf16>
    %c2_65 = arith.constant 2 : index
    %c0_66 = arith.constant 0 : index
    %c0_67 = arith.constant 0 : index
    %57 = vector.load %arg3[%c2_65, %c0_66, %c0_67] : memref<3x64x64xbf16, #tpu.memory_space<vmem>>, vector<1x64x64xbf16>
    %58 = vector.shape_cast %57 : vector<1x64x64xbf16> to vector<64x64xbf16>
    %cst_68 = arith.constant dense<0.000000e+00> : vector<16x64xf32>
    %59 = tpu.matmul %56, %58, %cst_68 {dimension_numbers = #tpu.dot_dimension_numbers<[1], [0], [0], [1], [0, 0, 1, 1], [], []>} : vector<16x64xbf16>, vector<64x64xbf16>, vector<16x64xf32> -> vector<16x64xf32>
    %60 = arith.addf %54, %59 : vector<16x64xf32>
    %c0_69 = arith.constant 0 : index
    %c0_70 = arith.constant 0 : index
    %61 = vector.load %arg7[%c0_69, %c0_70] : memref<16x64xf32, #tpu.memory_space<vmem>>, vector<16x64xf32>
    tpu.vector_store %arg7[%c0_69, %c0_70], %60 {strides = array<i32>} : memref<16x64xf32, #tpu.memory_space<vmem>>, vector<16x64xf32>,
    %c0_71 = arith.constant 0 : index
    %c0_72 = arith.constant 0 : index
    %62 = vector.load %arg7[%c0_71, %c0_72] : memref<16x64xf32, #tpu.memory_space<vmem>>, vector<16x64xf32>
    %c2_73 = arith.constant 2 : index
    %c0_74 = arith.constant 0 : index
    %63 = vector.load %arg4[%c2_73, %c0_74] : memref<4x64xf32, #tpu.memory_space<vmem>>, vector<1x64xf32>
    %64 = vector.broadcast %63 : vector<1x64xf32> to vector<16x64xf32>
    %65 = arith.mulf %62, %64 : vector<16x64xf32>
    %c3 = arith.constant 3 : index
    %c0_75 = arith.constant 0 : index
    %66 = vector.load %arg4[%c3, %c0_75] : memref<4x64xf32, #tpu.memory_space<vmem>>, vector<1x64xf32>
    %67 = vector.broadcast %66 : vector<1x64xf32> to vector<16x64xf32>
    %68 = arith.addf %65, %67 : vector<16x64xf32>
    %c0_76 = arith.constant 0 : index
    %c0_77 = arith.constant 0 : index
    %c0_78 = arith.constant 0 : index
    %69 = vector.load %arg1[%c0_76, %c0_77, %c0_78] : memref<1x16x64xbf16, #tpu.memory_space<vmem>>, vector<1x16x64xbf16>
    %70 = vector.shape_cast %69 : vector<1x16x64xbf16> to vector<16x64xbf16>
    %71 = arith.extf %70 : vector<16x64xbf16> to vector<16x64xf32>
    %72 = arith.addf %68, %71 : vector<16x64xf32>
    %cst_79 = arith.constant 0.000000e+00 : f32
    %73 = vector.broadcast %cst_79 : f32 to vector<16x64xf32>
    %74 = arith.maximumf %72, %73 : vector<16x64xf32>
    %c0_80 = arith.constant 0 : index
    %c0_81 = arith.constant 0 : index
    %c0_82 = arith.constant 0 : index
    %75 = vector.load %arg5[%c0_80, %c0_81, %c0_82] : memref<1x16x64xf32, #tpu.memory_space<vmem>>, vector<1x16x64xf32>
    %76 = vector.shape_cast %75 : vector<1x16x64xf32> to vector<16x64xf32>
    %77 = vector.shape_cast %74 : vector<16x64xf32> to vector<1x16x64xf32>
    tpu.vector_store %arg5[%c0_80, %c0_81, %c0_82], %77 {strides = array<i32>} : memref<1x16x64xf32, #tpu.memory_space<vmem>>, vector<1x16x64xf32>,
    return
  }
  func.func @transform_0(%arg0: i32) -> (i32, i32, i32) {
    %c0_i32 = arith.constant 0 : i32
    %c0_i32_0 = arith.constant 0 : i32
    %c0_i32_1 = arith.constant 0 : i32
    return %arg0, %c0_i32, %c0_i32_0 : i32, i32, i32
  }
  func.func @transform_1(%arg0: i32) -> (i32, i32, i32) {
    %c0_i32 = arith.constant 0 : i32
    %c0_i32_0 = arith.constant 0 : i32
    %c0_i32_1 = arith.constant 0 : i32
    %c0_i32_2 = arith.constant 0 : i32
    return %c0_i32, %c0_i32_0, %c0_i32_1 : i32, i32, i32
  }
  func.func @transform_2(%arg0: i32) -> (i32, i32, i32) {
    %c0_i32 = arith.constant 0 : i32
    %c0_i32_0 = arith.constant 0 : i32
    %c0_i32_1 = arith.constant 0 : i32
    %c0_i32_2 = arith.constant 0 : i32
    return %c0_i32, %c0_i32_0, %c0_i32_1 : i32, i32, i32
  }
  func.func @transform_3(%arg0: i32) -> (i32, i32) {
    %c0_i32 = arith.constant 0 : i32
    %c0_i32_0 = arith.constant 0 : i32
    %c0_i32_1 = arith.constant 0 : i32
    return %c0_i32, %c0_i32_0 : i32, i32
  }
  func.func @transform_4(%arg0: i32) -> (i32, i32, i32) {
    %c0_i32 = arith.constant 0 : i32
    %c0_i32_0 = arith.constant 0 : i32
    %c0_i32_1 = arith.constant 0 : i32
    return %arg0, %c0_i32, %c0_i32_0 : i32, i32, i32
  }
}

</mosaic_0001>

<llo_original>
// kernel: tpu_custom_call.1
$region0: #{tpu_custom_call.1}
  #allocation0 [shape = 'u32[]', space=smem, size = 0x4, offset = 0x4, fixed_abs, tag = 'smem constant byte address 0x4 - core index']
  #allocation1 [shape = 'u32[144,128]{1,0:T(1,128)}', space=vmem, size = 0x12000, scoped, tag = 'internal scratch']
  #allocation2 [shape = 'f32[18,64]{1,0:T(8,128)}', space=vmem, size = 0x3000, scoped, tag = 'scratch operand']
  #allocation3 [shape = 'f32[16,64]{1,0:T(8,128)}', space=vmem, size = 0x2000, scoped, tag = 'scratch operand']
  %s0 = inlined_call_operand.hbm [shape: bf16[2,16,64], index: 0, kind: input, shape index: {}]
  %s1 = inlined_call_operand.hbm [shape: bf16[3,64,64], index: 1, kind: input, shape index: {}]
  %s2 = inlined_call_operand.hbm [shape: bf16[3,64,64], index: 2, kind: input, shape index: {}]
  %s3 = inlined_call_operand.vmem [shape: f32[4,64], index: 3, kind: input, shape index: {}]
  %s4 = inlined_call_operand.hbm [shape: f32[2,16,64], index: 4, kind: output, shape index: {}]
  %s5 = sld [smem:[#allocation0]]
  $region61: #{tpu_custom_call.1} parent=0
    _
  %s7 = ssub.s32 1, %s5
  %s8 = scalar_select 0, %s7, %s5
  $region1: #{tpu_custom_call.1} parent=0
    #allocation4 [shape = 'u8[8192]{0}', space=vmem, size = 0x2000, scoped, tag = 'input window, operand 0']
    #allocation5 [shape = 's32[2]{0}', space=sflag, size = 0x8, scoped, tag = 'scoped memory for tpu_custom_call.1']
    #allocation6 [shape = 's32[2]{0}', space=sflag, size = 0x8, scoped, tag = 'scoped memory for tpu_custom_call.1']
    #allocation7 [shape = 'u8[49152]{0}', space=vmem, size = 0xc000, scoped, tag = 'input window, operand 1, single buffered']
    #allocation8 [shape = 's32[1]{0}', space=sflag, size = 0x4, scoped, tag = 'scoped memory for tpu_custom_call.1']
    #allocation9 [shape = 'u8[49152]{0}', space=vmem, size = 0xc000, scoped, tag = 'input window, operand 2, single buffered']
    #allocation10 [shape = 'u8[16384]{0}', space=vmem, size = 0x4000, scoped, tag = 'output window, operand 0']
    %9 = vsyncpa [#allocation5], 0
    %s10 = scalar_lea.sflag [#allocation5], 1
    %11 = vsyncpa %s10, 0
    %12 = vsyncpa [#allocation8], 0
    %13 = vsyncpa [#allocation6], 0
    %s14 = scalar_lea.sflag [#allocation6], 1
    %15 = vsyncpa %s14, 0
    loop: start=0, step=1, limit=4
    $region2: #{tpu_custom_call.1} parent=1 // loop_pre_header
      _
    $region3: #{tpu_custom_call.1} parent=1 // loop_header
      %s17 = sphi 0, %s21
      %p18 = scmp.ge.s32.totalorder %s17, 4
      %s27 = sphi 0, %s29
      %s30 = sphi 0, %s27
      %s31 = sphi 0, %s30
      %s47 = sphi 0, %s31
      %s51 = sphi 0, %s51
      %s53 = sphi 0, %s51
      %s54 = sphi 0, %s53
      %s68 = sphi 0, %s54
      %s72 = sphi 0, %s72
      %s74 = sphi 0, %s72
      %s75 = sphi 0, %s74
      %s89 = sphi 0, %s75
      %s93 = sphi 0, %s93
      %s95 = sphi 0, %s93
      %s96 = sphi 0, %s95
      %s110 = sphi 0, %s96
      %s116 = sphi 0, %s118
      %s119 = sphi 0, %s116
      %s120 = sphi 0, %s119
      %s136 = sphi 0, %s120
    $region4: #{tpu_custom_call.1} parent=1 // loop_header_branch
      %20 = sbr.rel (%p18) target = $region8
    $region5: #{tpu_custom_call.1} parent=1 // loop_body
      %s22 = ssub.s32 %s17, 1
      %s23 = ssub.s32 %s17, 2
      %s24 = sadd.s32 %s17, 1
      %s25 = ssub.s32 %s17, %s24
      %p26 = scmp.eq.s32.totalorder %s25, 0
      %s28 = sadd.s32 %s27, 1
      %s29 = scalar_select %p26, %s27, %s28
      %p32 = pneg %p26
      %p33 = scmp.eq.s32.totalorder %s17, 1
      %p34 = por %p32, %p33
      %p35 = scmp.ne.s32.totalorder %s27, %s30
      %p36 = scmp.eq.s32.totalorder %s17, 0
      %p37 = por %p35, %p36
      %p38 = scmp.ne.s32.totalorder %s27, %s30
      %p39 = scmp.eq.s32.totalorder %s22, 1
      %p40 = por %p38, %p39
      %p41 = scmp.ne.s32.totalorder %s30, %s31
      %p42 = scmp.eq.s32.totalorder %s22, 0
      %p43 = por %p41, %p42
      %p44 = scmp.ne.s32.totalorder %s30, %s31
      %p45 = scmp.eq.s32.totalorder %s23, 1
      %p46 = por %p44, %p45
      %p48 = scmp.ne.s32.totalorder %s31, %s47
      %p49 = scmp.eq.s32.totalorder %s23, 0
      %p50 = por %p48, %p49
      %s52 = sadd.s32 %s51, 1
      %p55 = scmp.eq.s32.totalorder %s17, 1
      %p56 = scmp.ne.s32.totalorder %s51, %s53
      %p57 = scmp.eq.s32.totalorder %s17, 0
      %p58 = por %p56, %p57
      %p59 = scmp.ne.s32.totalorder %s51, %s53
      %p60 = scmp.eq.s32.totalorder %s22, 1
      %p61 = por %p59, %p60
      %p62 = scmp.ne.s32.totalorder %s53, %s54
      %p63 = scmp.eq.s32.totalorder %s22, 0
      %p64 = por %p62, %p63
      %p65 = scmp.ne.s32.totalorder %s53, %s54
      %p66 = scmp.eq.s32.totalorder %s23, 1
      %p67 = por %p65, %p66
      %p69 = scmp.ne.s32.totalorder %s54, %s68
      %p70 = scmp.eq.s32.totalorder %s23, 0
      %p71 = por %p69, %p70
      %s73 = sadd.s32 %s72, 1
      %p76 = scmp.eq.s32.totalorder %s17, 1
      %p77 = scmp.ne.s32.totalorder %s72, %s74
      %p78 = scmp.eq.s32.totalorder %s17, 0
      %p79 = por %p77, %p78
      %p80 = scmp.ne.s32.totalorder %s72, %s74
      %p81 = scmp.eq.s32.totalorder %s22, 1
      %p82 = por %p80, %p81
      %p83 = scmp.ne.s32.totalorder %s74, %s75
      %p84 = scmp.eq.s32.totalorder %s22, 0
      %p85 = por %p83, %p84
      %p86 = scmp.ne.s32.totalorder %s74, %s75
      %p87 = scmp.eq.s32.totalorder %s23, 1
      %p88 = por %p86, %p87
      %p90 = scmp.ne.s32.totalorder %s75, %s89
      %p91 = scmp.eq.s32.totalorder %s23, 0
      %p92 = por %p90, %p91
      %s94 = sadd.s32 %s93, 1
      %p97 = scmp.eq.s32.totalorder %s17, 1
      %p98 = scmp.ne.s32.totalorder %s93, %s95
      %p99 = scmp.eq.s32.totalorder %s17, 0
      %p100 = por %p98, %p99
      %p101 = scmp.ne.s32.totalorder %s93, %s95
      %p102 = scmp.eq.s32.totalorder %s22, 1
      %p103 = por %p101, %p102
      %p104 = scmp.ne.s32.totalorder %s95, %s96
      %p105 = scmp.eq.s32.totalorder %s22, 0
      %p106 = por %p104, %p105
      %p107 = scmp.ne.s32.totalorder %s95, %s96
      %p108 = scmp.eq.s32.totalorder %s23, 1
      %p109 = por %p107, %p108
      %p111 = scmp.ne.s32.totalorder %s96, %s110
      %p112 = scmp.eq.s32.totalorder %s23, 0
      %p113 = por %p111, %p112
      %s114 = ssub.s32 %s17, %s24
      %p115 = scmp.eq.s32.totalorder %s114, 0
      %s117 = sadd.s32 %s116, 1
      %s118 = scalar_select %p115, %s116, %s117
      %p121 = pneg %p115
      %p122 = scmp.eq.s32.totalorder %s17, 1
      %p123 = por %p121, %p122
      %p124 = scmp.ne.s32.totalorder %s116, %s119
      %p125 = scmp.eq.s32.totalorder %s17, 0
      %p126 = por %p124, %p125
      %p127 = scmp.ne.s32.totalorder %s116, %s119
      %p128 = scmp.eq.s32.totalorder %s22, 1
      %p129 = por %p127, %p128
      %p130 = scmp.ne.s32.totalorder %s119, %s120
      %p131 = scmp.eq.s32.totalorder %s22, 0
      %p132 = por %p130, %p131
      %p133 = scmp.ne.s32.totalorder %s119, %s120
      %p134 = scmp.eq.s32.totalorder %s23, 1
      %p135 = por %p133, %p134
      %p137 = scmp.ne.s32.totalorder %s120, %s136
      %p138 = scmp.eq.s32.totalorder %s23, 0
      %p139 = por %p137, %p138
      %p140 = scmp.le.s32.totalorder 1, %s17
      %p141 = scmp.lt.s32.totalorder %s17, 3
      %p142 = pnand %p140, %p141
      %p143 = pneg %p142
      // Predicated region
      $region9: #{tpu_custom_call.1} parent=5 // pred_check
        _
      $region10: #{tpu_custom_call.1} parent=5 // pred_check_branch
        %145 = sbr.rel (%p142) target = $region12
      $region11: #{tpu_custom_call.1} parent=5 // pred_region
        %s146 = ssub.s32 %s17, 1
        // Predicated region
        $region13: #{tpu_custom_call.1} parent=11 // pred_check
          %p147 = pneg %p64
        $region14: #{tpu_custom_call.1} parent=11 // pred_check_branch
          %149 = sbr.rel (%p147) target = $region16
        $region15: #{tpu_custom_call.1} parent=11 // pred_region
          %s151 = ssub.s32 1536, 1536
          %152 = vsyncadd [#allocation8], %s151
          %s153 = sshll.u32 [#allocation7], 4
          %s154 = int_to_ptr.vmem [resolvable:$true] %s153
          %159 = dma.hbm_to_vmem [thread:$0]  %s1, 1536, %s154, [#allocation8], 64, 64, 4
        $region16: #{tpu_custom_call.1} parent=11 // pred_fallthru
          _
        // Predicated region
        $region17: #{tpu_custom_call.1} parent=11 // pred_check
          %p160 = pneg %p85
        $region18: #{tpu_custom_call.1} parent=11 // pred_check_branch
          %162 = sbr.rel (%p160) target = $region20
        $region19: #{tpu_custom_call.1} parent=11 // pred_region
          %s164 = ssub.s32 1536, 1536
          %165 = vsyncadd [#allocation8], %s164
          %s166 = sshll.u32 [#allocation9], 4
          %s167 = int_to_ptr.vmem [resolvable:$true] %s166
          %172 = dma.hbm_to_vmem [thread:$0]  %s2, 1536, %s167, [#allocation8], 64, 64, 4
        $region20: #{tpu_custom_call.1} parent=11 // pred_fallthru
          _
        // Predicated region
        $region21: #{tpu_custom_call.1} parent=11 // pred_check
          %p173 = pneg %p106
        $region22: #{tpu_custom_call.1} parent=11 // pred_check_branch
          %175 = sbr.rel (%p173) target = $region24
        $region23: #{tpu_custom_call.1} parent=11 // pred_region
          _
        $region24: #{tpu_custom_call.1} parent=11 // pred_fallthru
          _
      $region12: #{tpu_custom_call.1} parent=5 // pred_fallthru
        _
      %p176 = scmp.lt.s32.totalorder %s17, 2
      // Predicated region
      $region25: #{tpu_custom_call.1} parent=5 // pred_check
        %p177 = pneg %p176
      $region26: #{tpu_custom_call.1} parent=5 // pred_check_branch
        %179 = sbr.rel (%p177) target = $region28
      $region27: #{tpu_custom_call.1} parent=5 // pred_region
        // Predicated region
        $region29: #{tpu_custom_call.1} parent=27 // pred_check
          %p180 = pneg %p37
        $region30: #{tpu_custom_call.1} parent=27 // pred_check_branch
          %182 = sbr.rel (%p180) target = $region32
        $region31: #{tpu_custom_call.1} parent=27 // pred_region
          %s183 = sand.u32 %s27, 1
          %s184 = scalar_lea.sflag [#allocation5], %s183
          %s185 = sand.u32 %s27, 1
          %s186 = smul.addr %s185, 8
          %s187 = scalar_lea.vmem [#allocation4], %s186
          %s189 = ssub.s32 128, 128
          %190 = vsyncadd %s184, %s189
          %s191 = smul.addr %s17, 2
          %s192 = smul.addr %s191, 64
          %s193 = scalar_lea.hbm %s0, %s192
          %s194 = sshll.u32 %s187, 4
          %s195 = int_to_ptr.vmem [resolvable:$true] %s194
          %200 = dma.hbm_to_vmem [thread:$0]  %s193, 128, %s195, %s184, 64, 64, 4
        $region32: #{tpu_custom_call.1} parent=27 // pred_fallthru
          _
      $region28: #{tpu_custom_call.1} parent=5 // pred_fallthru
        _
      %p201 = scmp.le.s32.totalorder 1, %s17
      %p202 = scmp.lt.s32.totalorder %s17, 3
      %p203 = pnand %p201, %p202
      %p204 = pneg %p203
      // Predicated region
      $region33: #{tpu_custom_call.1} parent=5 // pred_check
        _
      $region34: #{tpu_custom_call.1} parent=5 // pred_check_branch
        %206 = sbr.rel (%p203) target = $region36
      $region35: #{tpu_custom_call.1} parent=5 // pred_region
        %s207 = ssub.s32 %s17, 1
        %s208 = sand.u32 %s30, 1
        %s209 = scalar_lea.sflag [#allocation5], %s208
        %s210 = sand.u32 %s30, 1
        %s211 = smul.addr %s210, 8
        %s212 = scalar_lea.vmem [#allocation4], %s211
        // Predicated region
        $region37: #{tpu_custom_call.1} parent=35 // pred_check
          %p213 = pneg %p43
        $region38: #{tpu_custom_call.1} parent=35 // pred_check_branch
          %215 = sbr.rel (%p213) target = $region40
        $region39: #{tpu_custom_call.1} parent=35 // pred_region
          %216 = dma.done %s209, 128
        $region40: #{tpu_custom_call.1} parent=35 // pred_fallthru
          _
        // Predicated region
        $region41: #{tpu_custom_call.1} parent=35 // pred_check
          %p217 = pneg %p64
        $region42: #{tpu_custom_call.1} parent=35 // pred_check_branch
          %219 = sbr.rel (%p217) target = $region44
        $region43: #{tpu_custom_call.1} parent=35 // pred_region
          %220 = dma.done [#allocation8], 1536
        $region44: #{tpu_custom_call.1} parent=35 // pred_fallthru
          _
        // Predicated region
        $region45: #{tpu_custom_call.1} parent=35 // pred_check
          %p221 = pneg %p85
        $region46: #{tpu_custom_call.1} parent=35 // pred_check_branch
          %223 = sbr.rel (%p221) target = $region48
        $region47: #{tpu_custom_call.1} parent=35 // pred_region
          %224 = dma.done [#allocation8], 1536
        $region48: #{tpu_custom_call.1} parent=35 // pred_fallthru
          _
        %s225 = sand.u32 %s30, 1
        %s226 = scalar_lea.sflag [#allocation5], %s225
        %s227 = sand.u32 %s30, 1
        %s228 = smul.addr %s227, 8
        %s229 = scalar_lea.vmem [#allocation4], %s228
        %p230 = pneg %p43
        %p231 = pneg %p40
        %p232 = pneg %p64
        %p233 = pneg %p61
        %p234 = pneg %p85
        %p235 = pneg %p82
        %p236 = pneg %p106
        %p237 = pneg %p103
        %p238 = pneg %p132
        %p239 = pneg %p129
        %s240 = sand.u32 %s119, 1
        %s241 = scalar_lea.sflag [#allocation6], %s240
        %s242 = sand.u32 %s119, 1
        %s243 = smul.addr %s242, 16
        %s244 = scalar_lea.vmem [#allocation10], %s243
        %vm246 = vcmask 516096
        %247 = vst.msk [vmem:[#allocation2] sm:$0x1] %vm246, 0.0
        %248 = vst.msk [vmem:[#allocation2 + $0x11] sm:$0x1] %vm246, 0.0
        %v249 = vld [vmem:[%s212] sm:$0xf]
        %v250 = vld [vmem:[%s212 + $0x4] sm:$0xf]
        %v251 = vunpack.c.l.bf16 %v249
        %v252 = vunpack.c.l.bf16 %v250
        %vm253 = vcmask 523264
        %254 = vst.msk [vmem:[#allocation2 + $0x1] sm:$0xff] %vm253, %v251
        %255 = vst.msk [vmem:[#allocation2 + $0x9] sm:$0xff] %vm253, %v252
        %v256 = vld [vmem:[#allocation2] sm:$0xff]
        %v257 = vld [vmem:[#allocation2 + $0x8] sm:$0xff]
        %v258 = vpack.c.bf16 %v257, %v256
        %v259 = vld [vmem:[#allocation7] sm:$0xf]
        %v260 = vld [vmem:[#allocation7 + $0x4] sm:$0xf]
        %v261 = vld [vmem:[#allocation7 + $0x8] sm:$0xf]
        %v262 = vld [vmem:[#allocation7 + $0xc] sm:$0xf]
        %v263 = vld [vmem:[#allocation7 + $0x10] sm:$0xf]
        %v264 = vld [vmem:[#allocation7 + $0x14] sm:$0xf]
        %v265 = vld [vmem:[#allocation7 + $0x18] sm:$0xf]
        %v266 = vld [vmem:[#allocation7 + $0x1c] sm:$0xf]
        %v275 = vunpack.c.l.b16 %v259
        %v276 = vunpack.c.l.b16 %v260
        %v277 = vunpack.c.l.b16 %v261
        %v278 = vunpack.c.l.b16 %v262
        %v279 = vunpack.c.l.b16 %v263
        %v280 = vunpack.c.l.b16 %v264
        %v281 = vunpack.c.l.b16 %v265
        %v282 = vunpack.c.l.b16 %v266
        %v283 = vpack.c.b16 %v276, %v275
        %v284 = vpack.c.b16 %v278, %v277
        %v285 = vpack.c.b16 %v280, %v279
        %v286 = vpack.c.b16 %v282, %v281
        %v292 = vsel %vm253, %v258, 0
        %294 = vmatprep.subr.bf16.mxu0 0
        %295 = vmatpush1.bf16.msra.mxu0 0
        %296 = vmatprep.subr.bf16.mxu0 0
        %297 = vmatpush1.bf16.msra.mxu0 0
        %298 = vmatprep.subr.bf16.mxu0 0
        %299 = vmatpush1.bf16.msra.mxu0 0
        %300 = vmatprep.subr.bf16.mxu0 0
        %301 = vmatpush1.bf16.msra.mxu0 0
        %302 = vmatprep.subr.bf16.mxu0 0
        %303 = vmatpush1.bf16.msra.mxu0 %v286
        %304 = vmatprep.subr.bf16.mxu0 0
        %305 = vmatpush1.bf16.msra.mxu0 %v285
        %306 = vmatprep.subr.bf16.mxu0 0
        %307 = vmatpush1.bf16.msra.mxu0 %v284
        %308 = vmatprep.subr.bf16.mxu0 0
        %309 = vmatpush1.bf16.msra.mxu0 %v283
        %310 = vmatprep.subr.bf16.mxu0 0
        %311 = vmatpush2.bf16.msra.mxu0 0
        %312 = vmatprep.subr.bf16.mxu0 0
        %313 = vmatpush2.bf16.msra.mxu0 0
        %314 = vmatprep.subr.bf16.mxu0 0
        %315 = vmatpush2.bf16.msra.mxu0 0
        %316 = vmatprep.subr.bf16.mxu0 0
        %317 = vmatpush2.bf16.msra.mxu0 0
        %318 = vmatprep.subr.bf16.mxu0 0
        %319 = vmatpush2.bf16.msra.mxu0 0
        %320 = vmatprep.subr.bf16.mxu0 0
        %321 = vmatpush2.bf16.msra.mxu0 0
        %322 = vmatprep.subr.bf16.mxu0 0
        %323 = vmatpush2.bf16.msra.mxu0 0
        %324 = vmatprep.subr.bf16.mxu0 0
        %325 = vmatpush2.bf16.msra.mxu0 0
        %326 = vmatprep.mubr.bf16.mxu0 0
        %327 = vmatmul.mubr.bf16.gmra.mxu0 %v292
        %v328 = vpop.f32.mrf.mxu0
        %v329 = vadd.f32 0.0, %v328
        %v330 = vpop.f32.mrf.mxu0
        %v331 = vpop.f32.mrf.mxu0
        %v332 = vadd.f32 0.0, %v331
        %v333 = vpop.f32.mrf.mxu0
        %334 = vdwg.mxu0
        %335 = vst.msk [vmem:[#allocation3] sm:$0xff] %vm253, %v329
        %336 = vst.msk [vmem:[#allocation3 + $0x8] sm:$0xff] %vm253, %v332
        %v337 = vld [vmem:[#allocation3] sm:$0xff]
        %v338 = vld [vmem:[#allocation3 + $0x8] sm:$0xff]
        %v339 = vld [vmem:[#allocation2 + $0x1] sm:$0xff]
        %v340 = vld [vmem:[#allocation2 + $0x9] sm:$0xff]
        %v341 = vpack.c.bf16 %v340, %v339
        %s342 = scalar_lea.vmem [#allocation7], 32
        %v343 = vld [vmem:[%s342] sm:$0xf]
        %v344 = vld [vmem:[%s342 + $0x4] sm:$0xf]
        %v345 = vld [vmem:[%s342 + $0x8] sm:$0xf]
        %v346 = vld [vmem:[%s342 + $0xc] sm:$0xf]
        %v347 = vld [vmem:[%s342 + $0x10] sm:$0xf]
        %v348 = vld [vmem:[%s342 + $0x14] sm:$0xf]
        %v349 = vld [vmem:[%s342 + $0x18] sm:$0xf]
        %v350 = vld [vmem:[%s342 + $0x1c] sm:$0xf]
        %v359 = vunpack.c.l.b16 %v343
        %v360 = vunpack.c.l.b16 %v344
        %v361 = vunpack.c.l.b16 %v345
        %v362 = vunpack.c.l.b16 %v346
        %v363 = vunpack.c.l.b16 %v347
        %v364 = vunpack.c.l.b16 %v348
        %v365 = vunpack.c.l.b16 %v349
        %v366 = vunpack.c.l.b16 %v350
        %v367 = vpack.c.b16 %v360, %v359
        %v368 = vpack.c.b16 %v362, %v361
        %v369 = vpack.c.b16 %v364, %v363
        %v370 = vpack.c.b16 %v366, %v365
        %v376 = vsel %vm253, %v341, 0
        %378 = vmatprep.subr.bf16.mxu0 0
        %379 = vmatpush1.bf16.msra.mxu0 0
        %380 = vmatprep.subr.bf16.mxu0 0
        %381 = vmatpush1.bf16.msra.mxu0 0
        %382 = vmatprep.subr.bf16.mxu0 0
        %383 = vmatpush1.bf16.msra.mxu0 0
        %384 = vmatprep.subr.bf16.mxu0 0
        %385 = vmatpush1.bf16.msra.mxu0 0
        %386 = vmatprep.subr.bf16.mxu0 0
        %387 = vmatpush1.bf16.msra.mxu0 %v370
        %388 = vmatprep.subr.bf16.mxu0 0
        %389 = vmatpush1.bf16.msra.mxu0 %v369
        %390 = vmatprep.subr.bf16.mxu0 0
        %391 = vmatpush1.bf16.msra.mxu0 %v368
        %392 = vmatprep.subr.bf16.mxu0 0
        %393 = vmatpush1.bf16.msra.mxu0 %v367
        %394 = vmatprep.subr.bf16.mxu0 0
        %395 = vmatpush2.bf16.msra.mxu0 0
        %396 = vmatprep.subr.bf16.mxu0 0
        %397 = vmatpush2.bf16.msra.mxu0 0
        %398 = vmatprep.subr.bf16.mxu0 0
        %399 = vmatpush2.bf16.msra.mxu0 0
        %400 = vmatprep.subr.bf16.mxu0 0
        %401 = vmatpush2.bf16.msra.mxu0 0
        %402 = vmatprep.subr.bf16.mxu0 0
        %403 = vmatpush2.bf16.msra.mxu0 0
        %404 = vmatprep.subr.bf16.mxu0 0
        %405 = vmatpush2.bf16.msra.mxu0 0
        %406 = vmatprep.subr.bf16.mxu0 0
        %407 = vmatpush2.bf16.msra.mxu0 0
        %408 = vmatprep.subr.bf16.mxu0 0
        %409 = vmatpush2.bf16.msra.mxu0 0
        %410 = vmatprep.mubr.bf16.mxu0 0
        %411 = vmatmul.mubr.bf16.gmra.mxu0 %v376
        %v412 = vpop.f32.mrf.mxu0
        %v413 = vadd.f32 0.0, %v412
        %v414 = vpop.f32.mrf.mxu0
        %v415 = vpop.f32.mrf.mxu0
        %v416 = vadd.f32 0.0, %v415
        %v417 = vpop.f32.mrf.mxu0
        %418 = vdwg.mxu0
        %v419 = vadd.f32 %v337, %v413
        %v420 = vadd.f32 %v338, %v416
        %421 = vst.msk [vmem:[#allocation3] sm:$0xff] %vm253, %v419
        %422 = vst.msk [vmem:[#allocation3 + $0x8] sm:$0xff] %vm253, %v420
        %v423 = vld [vmem:[#allocation3] sm:$0xff]
        %v424 = vld [vmem:[#allocation3 + $0x8] sm:$0xff]
        %v425 = vld [vmem:[#allocation2 + $0x2] sm:$0xff]
        %v426 = vld [vmem:[#allocation2 + $0xa] sm:$0xff]
        %v427 = vpack.c.bf16 %v426, %v425
        %s428 = scalar_lea.vmem [#allocation7], 64
        %v429 = vld [vmem:[%s428] sm:$0xf]
        %v430 = vld [vmem:[%s428 + $0x4] sm:$0xf]
        %v431 = vld [vmem:[%s428 + $0x8] sm:$0xf]
        %v432 = vld [vmem:[%s428 + $0xc] sm:$0xf]
        %v433 = vld [vmem:[%s428 + $0x10] sm:$0xf]
        %v434 = vld [vmem:[%s428 + $0x14] sm:$0xf]
        %v435 = vld [vmem:[%s428 + $0x18] sm:$0xf]
        %v436 = vld [vmem:[%s428 + $0x1c] sm:$0xf]
        %v445 = vunpack.c.l.b16 %v429
        %v446 = vunpack.c.l.b16 %v430
        %v447 = vunpack.c.l.b16 %v431
        %v448 = vunpack.c.l.b16 %v432
        %v449 = vunpack.c.l.b16 %v433
        %v450 = vunpack.c.l.b16 %v434
        %v451 = vunpack.c.l.b16 %v435
        %v452 = vunpack.c.l.b16 %v436
        %v453 = vpack.c.b16 %v446, %v445
        %v454 = vpack.c.b16 %v448, %v447
        %v455 = vpack.c.b16 %v450, %v449
        %v456 = vpack.c.b16 %v452, %v451
        %v462 = vsel %vm253, %v427, 0
        %464 = vmatprep.subr.bf16.mxu0 0
        %465 = vmatpush1.bf16.msra.mxu0 0
        %466 = vmatprep.subr.bf16.mxu0 0
        %467 = vmatpush1.bf16.msra.mxu0 0
        %468 = vmatprep.subr.bf16.mxu0 0
        %469 = vmatpush1.bf16.msra.mxu0 0
        %470 = vmatprep.subr.bf16.mxu0 0
        %471 = vmatpush1.bf16.msra.mxu0 0
        %472 = vmatprep.subr.bf16.mxu0 0
        %473 = vmatpush1.bf16.msra.mxu0 %v456
        %474 = vmatprep.subr.bf16.mxu0 0
        %475 = vmatpush1.bf16.msra.mxu0 %v455
        %476 = vmatprep.subr.bf16.mxu0 0
        %477 = vmatpush1.bf16.msra.mxu0 %v454
        %478 = vmatprep.subr.bf16.mxu0 0
        %479 = vmatpush1.bf16.msra.mxu0 %v453
        %480 = vmatprep.subr.bf16.mxu0 0
        %481 = vmatpush2.bf16.msra.mxu0 0
        %482 = vmatprep.subr.bf16.mxu0 0
        %483 = vmatpush2.bf16.msra.mxu0 0
        %484 = vmatprep.subr.bf16.mxu0 0
        %485 = vmatpush2.bf16.msra.mxu0 0
        %486 = vmatprep.subr.bf16.mxu0 0
        %487 = vmatpush2.bf16.msra.mxu0 0
        %488 = vmatprep.subr.bf16.mxu0 0
        %489 = vmatpush2.bf16.msra.mxu0 0
        %490 = vmatprep.subr.bf16.mxu0 0
        %491 = vmatpush2.bf16.msra.mxu0 0
        %492 = vmatprep.subr.bf16.mxu0 0
        %493 = vmatpush2.bf16.msra.mxu0 0
        %494 = vmatprep.subr.bf16.mxu0 0
        %495 = vmatpush2.bf16.msra.mxu0 0
        %496 = vmatprep.mubr.bf16.mxu0 0
        %497 = vmatmul.mubr.bf16.gmra.mxu0 %v462
        %v498 = vpop.f32.mrf.mxu0
        %v499 = vadd.f32 0.0, %v498
        %v500 = vpop.f32.mrf.mxu0
        %v501 = vpop.f32.mrf.mxu0
        %v502 = vadd.f32 0.0, %v501
        %v503 = vpop.f32.mrf.mxu0
        %504 = vdwg.mxu0
        %v505 = vadd.f32 %v423, %v499
        %v506 = vadd.f32 %v424, %v502
        %507 = vst.msk [vmem:[#allocation3] sm:$0xff] %vm253, %v505
        %508 = vst.msk [vmem:[#allocation3 + $0x8] sm:$0xff] %vm253, %v506
        %v509 = vld [vmem:[#allocation3] sm:$0xff]
        %v510 = vld [vmem:[#allocation3 + $0x8] sm:$0xff]
        %v511 = vld [vmem:[%s3] sm:$0x1]
        %v512 = vlaneseq
        %v513 = vshrl.u32 %v512, 7
        %v514 = vsub.s32 0, %v513
        %v515 = vrot.slane %v511, %v514
        %v516 = vmul.f32 %v509, %v515
        %v517 = vmul.f32 %v510, %v515
        %v518 = vld [vmem:[%s3 + $0x1] sm:$0x1]
        %v519 = vlaneseq
        %v520 = vshrl.u32 %v519, 7
        %v521 = vsub.s32 0, %v520
        %v522 = vrot.slane %v518, %v521
        %v523 = vadd.f32 %v516, %v522
        %v524 = vadd.f32 %v517, %v522
        %v525 = vmax.f32 %v523, 0.0
        %v526 = vmax.f32 %v524, 0.0
        %527 = vst.msk [vmem:[#allocation2 + $0x1] sm:$0xff] %vm253, %v525
        %528 = vst.msk [vmem:[#allocation2 + $0x9] sm:$0xff] %vm253, %v526
        %v529 = vld [vmem:[#allocation2] sm:$0xff]
        %v530 = vld [vmem:[#allocation2 + $0x8] sm:$0xff]
        %v531 = vpack.c.bf16 %v530, %v529
        %v532 = vld [vmem:[#allocation9] sm:$0xf]
        %v533 = vld [vmem:[#allocation9 + $0x4] sm:$0xf]
        %v534 = vld [vmem:[#allocation9 + $0x8] sm:$0xf]
        %v535 = vld [vmem:[#allocation9 + $0xc] sm:$0xf]
        %v536 = vld [vmem:[#allocation9 + $0x10] sm:$0xf]
        %v537 = vld [vmem:[#allocation9 + $0x14] sm:$0xf]
        %v538 = vld [vmem:[#allocation9 + $0x18] sm:$0xf]
        %v539 = vld [vmem:[#allocation9 + $0x1c] sm:$0xf]
        %v548 = vunpack.c.l.b16 %v532
        %v549 = vunpack.c.l.b16 %v533
        %v550 = vunpack.c.l.b16 %v534
        %v551 = vunpack.c.l.b16 %v535
        %v552 = vunpack.c.l.b16 %v536
        %v553 = vunpack.c.l.b16 %v537
        %v554 = vunpack.c.l.b16 %v538
        %v555 = vunpack.c.l.b16 %v539
        %v556 = vpack.c.b16 %v549, %v548
        %v557 = vpack.c.b16 %v551, %v550
        %v558 = vpack.c.b16 %v553, %v552
        %v559 = vpack.c.b16 %v555, %v554
        %v565 = vsel %vm253, %v531, 0
        %567 = vmatprep.subr.bf16.mxu0 0
        %568 = vmatpush1.bf16.msra.mxu0 0
        %569 = vmatprep.subr.bf16.mxu0 0
        %570 = vmatpush1.bf16.msra.mxu0 0
        %571 = vmatprep.subr.bf16.mxu0 0
        %572 = vmatpush1.bf16.msra.mxu0 0
        %573 = vmatprep.subr.bf16.mxu0 0
        %574 = vmatpush1.bf16.msra.mxu0 0
        %575 = vmatprep.subr.bf16.mxu0 0
        %576 = vmatpush1.bf16.msra.mxu0 %v559
        %577 = vmatprep.subr.bf16.mxu0 0
        %578 = vmatpush1.bf16.msra.mxu0 %v558
        %579 = vmatprep.subr.bf16.mxu0 0
        %580 = vmatpush1.bf16.msra.mxu0 %v557
        %581 = vmatprep.subr.bf16.mxu0 0
        %582 = vmatpush1.bf16.msra.mxu0 %v556
        %583 = vmatprep.subr.bf16.mxu0 0
        %584 = vmatpush2.bf16.msra.mxu0 0
        %585 = vmatprep.subr.bf16.mxu0 0
        %586 = vmatpush2.bf16.msra.mxu0 0
        %587 = vmatprep.subr.bf16.mxu0 0
        %588 = vmatpush2.bf16.msra.mxu0 0
        %589 = vmatprep.subr.bf16.mxu0 0
        %590 = vmatpush2.bf16.msra.mxu0 0
        %591 = vmatprep.subr.bf16.mxu0 0
        %592 = vmatpush2.bf16.msra.mxu0 0
        %593 = vmatprep.subr.bf16.mxu0 0
        %594 = vmatpush2.bf16.msra.mxu0 0
        %595 = vmatprep.subr.bf16.mxu0 0
        %596 = vmatpush2.bf16.msra.mxu0 0
        %597 = vmatprep.subr.bf16.mxu0 0
        %598 = vmatpush2.bf16.msra.mxu0 0
        %599 = vmatprep.mubr.bf16.mxu0 0
        %600 = vmatmul.mubr.bf16.gmra.mxu0 %v565
        %v601 = vpop.f32.mrf.mxu0
        %v602 = vadd.f32 0.0, %v601
        %v603 = vpop.f32.mrf.mxu0
        %v604 = vpop.f32.mrf.mxu0
        %v605 = vadd.f32 0.0, %v604
        %v606 = vpop.f32.mrf.mxu0
        %607 = vdwg.mxu0
        %608 = vst.msk [vmem:[#allocation3] sm:$0xff] %vm253, %v602
        %609 = vst.msk [vmem:[#allocation3 + $0x8] sm:$0xff] %vm253, %v605
        %v610 = vld [vmem:[#allocation3] sm:$0xff]
        %v611 = vld [vmem:[#allocation3 + $0x8] sm:$0xff]
        %v612 = vld [vmem:[#allocation2 + $0x1] sm:$0xff]
        %v613 = vld [vmem:[#allocation2 + $0x9] sm:$0xff]
        %v614 = vpack.c.bf16 %v613, %v612
        %s615 = scalar_lea.vmem [#allocation9], 32
        %v616 = vld [vmem:[%s615] sm:$0xf]
        %v617 = vld [vmem:[%s615 + $0x4] sm:$0xf]
        %v618 = vld [vmem:[%s615 + $0x8] sm:$0xf]
        %v619 = vld [vmem:[%s615 + $0xc] sm:$0xf]
        %v620 = vld [vmem:[%s615 + $0x10] sm:$0xf]
        %v621 = vld [vmem:[%s615 + $0x14] sm:$0xf]
        %v622 = vld [vmem:[%s615 + $0x18] sm:$0xf]
        %v623 = vld [vmem:[%s615 + $0x1c] sm:$0xf]
        %v632 = vunpack.c.l.b16 %v616
        %v633 = vunpack.c.l.b16 %v617
        %v634 = vunpack.c.l.b16 %v618
        %v635 = vunpack.c.l.b16 %v619
        %v636 = vunpack.c.l.b16 %v620
        %v637 = vunpack.c.l.b16 %v621
        %v638 = vunpack.c.l.b16 %v622
        %v639 = vunpack.c.l.b16 %v623
        %v640 = vpack.c.b16 %v633, %v632
        %v641 = vpack.c.b16 %v635, %v634
        %v642 = vpack.c.b16 %v637, %v636
        %v643 = vpack.c.b16 %v639, %v638
        %v649 = vsel %vm253, %v614, 0
        %651 = vmatprep.subr.bf16.mxu0 0
        %652 = vmatpush1.bf16.msra.mxu0 0
        %653 = vmatprep.subr.bf16.mxu0 0
        %654 = vmatpush1.bf16.msra.mxu0 0
        %655 = vmatprep.subr.bf16.mxu0 0
        %656 = vmatpush1.bf16.msra.mxu0 0
        %657 = vmatprep.subr.bf16.mxu0 0
        %658 = vmatpush1.bf16.msra.mxu0 0
        %659 = vmatprep.subr.bf16.mxu0 0
        %660 = vmatpush1.bf16.msra.mxu0 %v643
        %661 = vmatprep.subr.bf16.mxu0 0
        %662 = vmatpush1.bf16.msra.mxu0 %v642
        %663 = vmatprep.subr.bf16.mxu0 0
        %664 = vmatpush1.bf16.msra.mxu0 %v641
        %665 = vmatprep.subr.bf16.mxu0 0
        %666 = vmatpush1.bf16.msra.mxu0 %v640
        %667 = vmatprep.subr.bf16.mxu0 0
        %668 = vmatpush2.bf16.msra.mxu0 0
        %669 = vmatprep.subr.bf16.mxu0 0
        %670 = vmatpush2.bf16.msra.mxu0 0
        %671 = vmatprep.subr.bf16.mxu0 0
        %672 = vmatpush2.bf16.msra.mxu0 0
        %673 = vmatprep.subr.bf16.mxu0 0
        %674 = vmatpush2.bf16.msra.mxu0 0
        %675 = vmatprep.subr.bf16.mxu0 0
        %676 = vmatpush2.bf16.msra.mxu0 0
        %677 = vmatprep.subr.bf16.mxu0 0
        %678 = vmatpush2.bf16.msra.mxu0 0
        %679 = vmatprep.subr.bf16.mxu0 0
        %680 = vmatpush2.bf16.msra.mxu0 0
        %681 = vmatprep.subr.bf16.mxu0 0
        %682 = vmatpush2.bf16.msra.mxu0 0
        %683 = vmatprep.mubr.bf16.mxu0 0
        %684 = vmatmul.mubr.bf16.gmra.mxu0 %v649
        %v685 = vpop.f32.mrf.mxu0
        %v686 = vadd.f32 0.0, %v685
        %v687 = vpop.f32.mrf.mxu0
        %v688 = vpop.f32.mrf.mxu0
        %v689 = vadd.f32 0.0, %v688
        %v690 = vpop.f32.mrf.mxu0
        %691 = vdwg.mxu0
        %v692 = vadd.f32 %v610, %v686
        %v693 = vadd.f32 %v611, %v689
        %694 = vst.msk [vmem:[#allocation3] sm:$0xff] %vm253, %v692
        %695 = vst.msk [vmem:[#allocation3 + $0x8] sm:$0xff] %vm253, %v693
        %v696 = vld [vmem:[#allocation3] sm:$0xff]
        %v697 = vld [vmem:[#allocation3 + $0x8] sm:$0xff]
        %v698 = vld [vmem:[#allocation2 + $0x2] sm:$0xff]
        %v699 = vld [vmem:[#allocation2 + $0xa] sm:$0xff]
        %v700 = vpack.c.bf16 %v699, %v698
        %s701 = scalar_lea.vmem [#allocation9], 64
        %v702 = vld [vmem:[%s701] sm:$0xf]
        %v703 = vld [vmem:[%s701 + $0x4] sm:$0xf]
        %v704 = vld [vmem:[%s701 + $0x8] sm:$0xf]
        %v705 = vld [vmem:[%s701 + $0xc] sm:$0xf]
        %v706 = vld [vmem:[%s701 + $0x10] sm:$0xf]
        %v707 = vld [vmem:[%s701 + $0x14] sm:$0xf]
        %v708 = vld [vmem:[%s701 + $0x18] sm:$0xf]
        %v709 = vld [vmem:[%s701 + $0x1c] sm:$0xf]
        %v718 = vunpack.c.l.b16 %v702
        %v719 = vunpack.c.l.b16 %v703
        %v720 = vunpack.c.l.b16 %v704
        %v721 = vunpack.c.l.b16 %v705
        %v722 = vunpack.c.l.b16 %v706
        %v723 = vunpack.c.l.b16 %v707
        %v724 = vunpack.c.l.b16 %v708
        %v725 = vunpack.c.l.b16 %v709
        %v726 = vpack.c.b16 %v719, %v718
        %v727 = vpack.c.b16 %v721, %v720
        %v728 = vpack.c.b16 %v723, %v722
        %v729 = vpack.c.b16 %v725, %v724
        %v735 = vsel %vm253, %v700, 0
        %737 = vmatprep.subr.bf16.mxu0 0
        %738 = vmatpush1.bf16.msra.mxu0 0
        %739 = vmatprep.subr.bf16.mxu0 0
        %740 = vmatpush1.bf16.msra.mxu0 0
        %741 = vmatprep.subr.bf16.mxu0 0
        %742 = vmatpush1.bf16.msra.mxu0 0
        %743 = vmatprep.subr.bf16.mxu0 0
        %744 = vmatpush1.bf16.msra.mxu0 0
        %745 = vmatprep.subr.bf16.mxu0 0
        %746 = vmatpush1.bf16.msra.mxu0 %v729
        %747 = vmatprep.subr.bf16.mxu0 0
        %748 = vmatpush1.bf16.msra.mxu0 %v728
        %749 = vmatprep.subr.bf16.mxu0 0
        %750 = vmatpush1.bf16.msra.mxu0 %v727
        %751 = vmatprep.subr.bf16.mxu0 0
        %752 = vmatpush1.bf16.msra.mxu0 %v726
        %753 = vmatprep.subr.bf16.mxu0 0
        %754 = vmatpush2.bf16.msra.mxu0 0
        %755 = vmatprep.subr.bf16.mxu0 0
        %756 = vmatpush2.bf16.msra.mxu0 0
        %757 = vmatprep.subr.bf16.mxu0 0
        %758 = vmatpush2.bf16.msra.mxu0 0
        %759 = vmatprep.subr.bf16.mxu0 0
        %760 = vmatpush2.bf16.msra.mxu0 0
        %761 = vmatprep.subr.bf16.mxu0 0
        %762 = vmatpush2.bf16.msra.mxu0 0
        %763 = vmatprep.subr.bf16.mxu0 0
        %764 = vmatpush2.bf16.msra.mxu0 0
        %765 = vmatprep.subr.bf16.mxu0 0
        %766 = vmatpush2.bf16.msra.mxu0 0
        %767 = vmatprep.subr.bf16.mxu0 0
        %768 = vmatpush2.bf16.msra.mxu0 0
        %769 = vmatprep.mubr.bf16.mxu0 0
        %770 = vmatmul.mubr.bf16.gmra.mxu0 %v735
        %v771 = vpop.f32.mrf.mxu0
        %v772 = vadd.f32 0.0, %v771
        %v773 = vpop.f32.mrf.mxu0
        %v774 = vpop.f32.mrf.mxu0
        %v775 = vadd.f32 0.0, %v774
        %v776 = vpop.f32.mrf.mxu0
        %777 = vdwg.mxu0
        %v778 = vadd.f32 %v696, %v772
        %v779 = vadd.f32 %v697, %v775
        %780 = vst.msk [vmem:[#allocation3] sm:$0xff] %vm253, %v778
        %781 = vst.msk [vmem:[#allocation3 + $0x8] sm:$0xff] %vm253, %v779
        %v782 = vld [vmem:[#allocation3] sm:$0xff]
        %v783 = vld [vmem:[#allocation3 + $0x8] sm:$0xff]
        %v784 = vld [vmem:[%s3 + $0x2] sm:$0x1]
        %v785 = vlaneseq
        %v786 = vshrl.u32 %v785, 7
        %v787 = vsub.s32 0, %v786
        %v788 = vrot.slane %v784, %v787
        %v789 = vmul.f32 %v782, %v788
        %v790 = vmul.f32 %v783, %v788
        %v791 = vld [vmem:[%s3 + $0x3] sm:$0x1]
        %v792 = vlaneseq
        %v793 = vshrl.u32 %v792, 7
        %v794 = vsub.s32 0, %v793
        %v795 = vrot.slane %v791, %v794
        %v796 = vadd.f32 %v789, %v795
        %v797 = vadd.f32 %v790, %v795
        %v798 = vld [vmem:[%s212] sm:$0xf]
        %v799 = vld [vmem:[%s212 + $0x4] sm:$0xf]
        %v800 = vunpack.c.l.bf16 %v798
        %v801 = vunpack.c.l.bf16 %v799
        %v802 = vadd.f32 %v796, %v800
        %v803 = vadd.f32 %v797, %v801
        %v804 = vmax.f32 %v802, 0.0
        %v805 = vmax.f32 %v803, 0.0
        %806 = vst.msk [vmem:[%s244] sm:$0xff] %vm253, %v804
        %807 = vst.msk [vmem:[%s244 + $0x8] sm:$0xff] %vm253, %v805
        %s808 = sand.u32 %s119, 1
        %s809 = scalar_lea.sflag [#allocation6], %s808
        %s810 = sand.u32 %s119, 1
        %s811 = smul.addr %s810, 16
        %s812 = scalar_lea.vmem [#allocation10], %s811
        // Predicated region
        $region49: #{tpu_custom_call.1} parent=35 // pred_check
          %p813 = pneg %p129
        $region50: #{tpu_custom_call.1} parent=35 // pred_check_branch
          %815 = sbr.rel (%p813) target = $region52
        $region51: #{tpu_custom_call.1} parent=35 // pred_region
          %s817 = ssub.s32 256, 256
          %818 = vsyncadd %s809, %s817
          %s819 = smul.addr %s22, 2
          %s820 = smul.addr %s819, 128
          %s821 = scalar_lea.hbm %s4, %s820
          %s822 = sshll.u32 %s812, 4
          %s823 = int_to_ptr.vmem [resolvable:$true] %s822
          %828 = dma.vmem_to_hbm [thread:$0]  %s823, 256, %s821, %s809, 128, 128, 8
        $region52: #{tpu_custom_call.1} parent=35 // pred_fallthru
          _
      $region36: #{tpu_custom_call.1} parent=5 // pred_fallthru
        _
      %p829 = scmp.le.s32.totalorder 2, %s17
      // Predicated region
      $region53: #{tpu_custom_call.1} parent=5 // pred_check
        %p830 = pneg %p829
      $region54: #{tpu_custom_call.1} parent=5 // pred_check_branch
        %832 = sbr.rel (%p830) target = $region56
      $region55: #{tpu_custom_call.1} parent=5 // pred_region
        %s833 = ssub.s32 %s17, 2
        // Predicated region
        $region57: #{tpu_custom_call.1} parent=55 // pred_check
          %p834 = pneg %p135
        $region58: #{tpu_custom_call.1} parent=55 // pred_check_branch
          %836 = sbr.rel (%p834) target = $region60
        $region59: #{tpu_custom_call.1} parent=55 // pred_region
          %s837 = sand.u32 %s120, 1
          %s838 = scalar_lea.sflag [#allocation6], %s837
          %s839 = sand.u32 %s120, 1
          %s840 = smul.addr %s839, 16
          %s841 = scalar_lea.vmem [#allocation10], %s840
          %842 = dma.done %s838, 256
        $region60: #{tpu_custom_call.1} parent=55 // pred_fallthru
          _
      $region56: #{tpu_custom_call.1} parent=5 // pred_fallthru
        _
    $region6: #{tpu_custom_call.1} parent=1 // loop_footer
      %s21 = sadd.s32 1, %s17
    $region7: #{tpu_custom_call.1} parent=1 // loop_footer_branch
      %16 = sbr.rel target = $region3
    $region8: #{tpu_custom_call.1} parent=1 // loop_exit
      _
    %843 = vsyncpa [#allocation5], 1
    %s844 = scalar_lea.sflag [#allocation5], 1
    %845 = vsyncpa %s844, 1
    %846 = vsyncpa [#allocation8], 1
    %847 = vsyncpa [#allocation6], 1
    %s848 = scalar_lea.sflag [#allocation6], 1
    %849 = vsyncpa %s848, 1

</llo_original>
